<compile_context>
chip_gen: v6e
topology: v6e:2x2x1
jax: 0.10.0
libtpu: 0.0.40
codegen_flags: <defaults>
</compile_context>

<pallas_src>
import jax
import jax.numpy as jnp
from jax.experimental import pallas as pl
from jax.experimental.pallas import tpu as pltpu

GAMMA = 2.0     # FocalLoss gamma (kernel hard-codes the gamma==2 square)
SMOOTH = 1.0    # weight of the smoothness loss
EPS = 1e-6      # unused on the logits=True / no-mask path (matches PyTorch)

# Laplacian-style smoothing kernel from SmoothLoss:
#   [[-1,-1,-1],[-1,8,-1],[-1,-1,-1]] / 8  ==  1.125*x - 0.125*box3x3(x)
_SMOOTH_K = [[-0.125, -0.125, -0.125],
             [-0.125,  1.0,   -0.125],
             [-0.125, -0.125, -0.125]]


def _focal_seg_kernel(x_ref, t_ref, out_ref):
    x = x_ref[0]          # (H, W) logits for this image
    t = t_ref[0]          # (H, W) targets
    H, W = x.shape

    # ---- Focal BCE partial sum (numerically stable, shared exp) ----
    ax = jnp.abs(x)
    e = jnp.exp(-ax)                            # exp(-|x|) in (0, 1]
    # log(1 + e): argument is in (1, 2], never 0 -> no -inf/NaN.
    l1pe = jnp.log(1.0 + e)
    inv = 1.0 / (1.0 + e)
    pos = x >= 0.0
    p = jnp.where(pos, inv, e * inv)            # sigmoid(x)
    log_p = jnp.where(pos, -l1pe, x - l1pe)     # log sigmoid(x)   = log(p)
    log_1mp = jnp.where(pos, -x - l1pe, -l1pe)  # log sigmoid(-x)  = log(1-p)

    pt = t * p + (1.0 - t) * (1.0 - p)
    log_pt = t * log_p + (1.0 - t) * log_1mp
    one_m_pt = 1.0 - pt
    focal = -(one_m_pt * one_m_pt) * log_pt     # gamma == 2: explicit square
    focal_sum = jnp.sum(focal)

    # ---- Smooth partial sum: |conv2d(x, k, padding=1)| over this image ----
    # conv = 1.125*x - 0.125*box3x3(x) with zero padding; box sum is separable.
    col = jax.lax.broadcasted_iota(jnp.int32, (H, W), 1)
    row = jax.lax.broadcasted_iota(jnp.int32, (H, W), 0)
    x_r = jnp.where(col == 0, 0.0, pltpu.roll(x, W - 1, axis=1))   # x[:, j-1]
    x_l = jnp.where(col == W - 1, 0.0, pltpu.roll(x, 1, axis=1))   # wait-free XLU
    # NOTE: roll by (W-1) == roll by -1; use non-negative shifts.
    x_l = jnp.where(col == W - 1, 0.0, pltpu.roll(x, 1, axis=1))
    # Correct shift directions: roll(x, 1) moves element j -> j+1, i.e. the
    # value at position j is the old x[j-1] (left neighbor); roll(x, W-1)
    # brings x[j+1] (right neighbor) to position j.
    left = jnp.where(col == 0, 0.0, pltpu.roll(x, 1, axis=1))       # x[:, j-1]
    right = jnp.where(col == W - 1, 0.0, pltpu.roll(x, W - 1, axis=1))  # x[:, j+1]
    h3 = x + left + right
    up = jnp.where(row == 0, 0.0, pltpu.roll(h3, 1, axis=0))        # h3[i-1, :]
    down = jnp.where(row == H - 1, 0.0, pltpu.roll(h3, H - 1, axis=0))  # h3[i+1, :]
    box = h3 + up + down
    conv = 1.125 * x - 0.125 * box
    smooth_sum = jnp.sum(jnp.abs(conv))

    # ---- Lane-dense (1, 8, 128) partial-sum tile: [0,0,0]=focal, [0,0,1]=|conv| ----
    lane = jax.lax.broadcasted_iota(jnp.int32, (1, 8, 128), 2)
    sub = jax.lax.broadcasted_iota(jnp.int32, (1, 8, 128), 1)
    out_ref[...] = jnp.where((sub == 0) & (lane == 0), focal_sum,
                             jnp.where((sub == 0) & (lane == 1), smooth_sum, 0.0))


def focal_seg_loss(inp, target):
    """inp, target: (N, 1, H, W) float32 (NCHW, C must be 1). Returns scalar loss."""
    assert inp.shape == target.shape and inp.shape[1] == 1
    x = inp[:, 0, :, :].astype(jnp.float32)       # (N, H, W)
    t = target[:, 0, :, :].astype(jnp.float32)    # (N, H, W)
    N, H, W = x.shape

    # 2 inputs x 2 pipeline buffers x (H*W*4) bytes + small output, with headroom.
    block_bytes = H * W * 4
    vmem_limit = int(min(64 * 1024 * 1024, max(16 * 1024 * 1024, 8 * block_bytes)))

    partials = pl.pallas_call(
        _focal_seg_kernel,
        out_shape=jax.ShapeDtypeStruct((N, 8, 128), jnp.float32),
        grid=(N,),
        in_specs=[
            pl.BlockSpec((1, H, W), lambda n: (n, 0, 0)),
            pl.BlockSpec((1, H, W), lambda n: (n, 0, 0)),
        ],
        out_specs=pl.BlockSpec((1, 8, 128), lambda n: (n, 0, 0)),
        compiler_params=pltpu.CompilerParams(
            dimension_semantics=("parallel",),
            vmem_limit_bytes=vmem_limit),
    )(x, t)

    # Tiny final combine of per-image partial sums (N rows) in plain JAX.
    n_elems = jnp.float32(N * H * W)
    focal_total = jnp.sum(partials[:, 0, 0])
    smooth_total = jnp.sum(partials[:, 0, 1])
    return (focal_total + SMOOTH * smooth_total) / n_elems


def _reference(inp, target):
    """Pure-JAX reference mirroring the PyTorch module (for sanity check)."""
    x = inp.astype(jnp.float32)
    t = target.astype(jnp.float32)
    p = jax.nn.sigmoid(x)
    pt = t * p + (1.0 - t) * (1.0 - p)
    log_pt = t * jnp.log(p) + (1.0 - t) * jnp.log(1.0 - p)
    loss_bce = jnp.mean(-((1.0 - pt) ** GAMMA) * log_pt)
    k = jnp.array(_SMOOTH_K, dtype=jnp.float32).reshape(1, 1, 3, 3)
    conv = jax.lax.conv_general_dilated(
        x, k, window_strides=(1, 1), padding=((1, 1), (1, 1)),
        dimension_numbers=("NCHW", "OIHW", "NCHW"))
    loss_smooth = jnp.mean(jnp.abs(conv))
    return loss_bce + SMOOTH * loss_smooth


if __name__ == "__main__":
    key = jax.random.PRNGKey(0)
    k1, k2 = jax.random.split(key)
    # NCHW with C=1 (required by the (1,1,3,3) smooth kernel)
    x = jax.random.normal(k1, (2, 1, 16, 16), dtype=jnp.float32)
    tgt = (jax.random.uniform(k2, (2, 1, 16, 16)) > 0.5).astype(jnp.float32)

    loss = focal_seg_loss(x, tgt)
    loss = jax.block_until_ready(loss)

    ref = _reference(x, tgt)
    assert jnp.allclose(loss, ref, rtol=1e-4, atol=1e-5), (loss, ref)
    print("KERNEL_OK")
</pallas_src>

<mosaic_0001>
module attributes {stable_mosaic.version = 11 : i64} {
  func.func @_focal_seg_kernel(%arg0: i32, %arg1: memref<1x16x16xf32, #tpu.memory_space<vmem>>, %arg2: memref<1x16x16xf32, #tpu.memory_space<vmem>>, %arg3: memref<1x8x128xf32, #tpu.memory_space<vmem>>) attributes {dimension_semantics = [#tpu.dimension_semantics<parallel>], iteration_bounds = array<i64: 2>, scalar_prefetch = 0 : i64, scratch_operands = 0 : i64, tpu.core_type = #tpu.core_type<tc>, window_params = [{transform_indices = @transform_0, window_bounds = array<i64: 1, 16, 16>}, {transform_indices = @transform_1, window_bounds = array<i64: 1, 16, 16>}, {transform_indices = @transform_2, window_bounds = array<i64: 1, 8, 128>}]} {
    %c0 = arith.constant 0 : index
    %c0_0 = arith.constant 0 : index
    %c0_1 = arith.constant 0 : index
    %0 = vector.load %arg1[%c0, %c0_0, %c0_1] : memref<1x16x16xf32, #tpu.memory_space<vmem>>, vector<1x16x16xf32>
    %1 = vector.shape_cast %0 : vector<1x16x16xf32> to vector<16x16xf32>
    %c0_2 = arith.constant 0 : index
    %c0_3 = arith.constant 0 : index
    %c0_4 = arith.constant 0 : index
    %2 = vector.load %arg2[%c0_2, %c0_3, %c0_4] : memref<1x16x16xf32, #tpu.memory_space<vmem>>, vector<1x16x16xf32>
    %3 = vector.shape_cast %2 : vector<1x16x16xf32> to vector<16x16xf32>
    %4 = math.absf %1 : vector<16x16xf32>
    %cst = arith.constant 0.000000e+00 : f32
    %5 = vector.broadcast %cst : f32 to vector<16x16xf32>
    %6 = arith.subf %5, %4 : vector<16x16xf32>
    %7 = math.exp %6 : vector<16x16xf32>
    %cst_5 = arith.constant 1.000000e+00 : f32
    %8 = vector.broadcast %cst_5 : f32 to vector<16x16xf32>
    %9 = arith.addf %8, %7 : vector<16x16xf32>
    %10 = math.log %9 : vector<16x16xf32>
    %cst_6 = arith.constant 1.000000e+00 : f32
    %11 = vector.broadcast %cst_6 : f32 to vector<16x16xf32>
    %12 = arith.addf %11, %7 : vector<16x16xf32>
    %cst_7 = arith.constant 1.000000e+00 : f32
    %13 = vector.broadcast %cst_7 : f32 to vector<16x16xf32>
    %14 = arith.divf %13, %12 : vector<16x16xf32>
    %cst_8 = arith.constant 0.000000e+00 : f32
    %15 = vector.broadcast %cst_8 : f32 to vector<16x16xf32>
    %16 = arith.cmpf oge, %1, %15 : vector<16x16xf32>
    %17 = arith.mulf %7, %14 : vector<16x16xf32>
    %18 = arith.select %16, %14, %17 : vector<16x16xi1>, vector<16x16xf32>
    %cst_9 = arith.constant 0.000000e+00 : f32
    %19 = vector.broadcast %cst_9 : f32 to vector<16x16xf32>
    %20 = arith.subf %19, %10 : vector<16x16xf32>
    %21 = arith.subf %1, %10 : vector<16x16xf32>
    %22 = arith.select %16, %20, %21 : vector<16x16xi1>, vector<16x16xf32>
    %cst_10 = arith.constant 0.000000e+00 : f32
    %23 = vector.broadcast %cst_10 : f32 to vector<16x16xf32>
    %24 = arith.subf %23, %1 : vector<16x16xf32>
    %25 = arith.subf %24, %10 : vector<16x16xf32>
    %cst_11 = arith.constant 0.000000e+00 : f32
    %26 = vector.broadcast %cst_11 : f32 to vector<16x16xf32>
    %27 = arith.subf %26, %10 : vector<16x16xf32>
    %28 = arith.select %16, %25, %27 : vector<16x16xi1>, vector<16x16xf32>
    %29 = arith.mulf %3, %18 : vector<16x16xf32>
    %cst_12 = arith.constant 1.000000e+00 : f32
    %30 = vector.broadcast %cst_12 : f32 to vector<16x16xf32>
    %31 = arith.subf %30, %3 : vector<16x16xf32>
    %cst_13 = arith.constant 1.000000e+00 : f32
    %32 = vector.broadcast %cst_13 : f32 to vector<16x16xf32>
    %33 = arith.subf %32, %18 : vector<16x16xf32>
    %34 = arith.mulf %31, %33 : vector<16x16xf32>
    %35 = arith.addf %29, %34 : vector<16x16xf32>
    %36 = arith.mulf %3, %22 : vector<16x16xf32>
    %cst_14 = arith.constant 1.000000e+00 : f32
    %37 = vector.broadcast %cst_14 : f32 to vector<16x16xf32>
    %38 = arith.subf %37, %3 : vector<16x16xf32>
    %39 = arith.mulf %38, %28 : vector<16x16xf32>
    %40 = arith.addf %36, %39 : vector<16x16xf32>
    %cst_15 = arith.constant 1.000000e+00 : f32
    %41 = vector.broadcast %cst_15 : f32 to vector<16x16xf32>
    %42 = arith.subf %41, %35 : vector<16x16xf32>
    %43 = arith.mulf %42, %42 : vector<16x16xf32>
    %cst_16 = arith.constant 0.000000e+00 : f32
    %44 = vector.broadcast %cst_16 : f32 to vector<16x16xf32>
    %45 = arith.subf %44, %43 : vector<16x16xf32>
    %46 = arith.mulf %45, %40 : vector<16x16xf32>
    %47 = vector.shape_cast %46 : vector<16x16xf32> to vector<1x16x16xf32>
    %cst_17 = arith.constant dense<0.000000e+00> : vector<1xf32>
    %48 = vector.multi_reduction <add>, %47, %cst_17 [1, 2] : vector<1x16x16xf32> to vector<1xf32>
    %49 = vector.shape_cast %48 : vector<1xf32> to vector<1x1x1xf32>
    %50 = vector.extract %49[0, 0, 0] : f32 from vector<1x1x1xf32>
    %51 = tpu.iota {dimensions = array<i32: 1>} : vector<16x16xi32>
    %52 = tpu.iota {dimensions = array<i32: 0>} : vector<16x16xi32>
    %c0_i32 = arith.constant 0 : i32
    %53 = vector.broadcast %c0_i32 : i32 to vector<16x16xi32>
    %54 = arith.cmpi eq, %51, %53 : vector<16x16xi32>
    %c1_i32 = arith.constant 1 : i32
    %55 = tpu.dynamic_rotate %1 by %c1_i32 dim 1 : vector<16x16xf32>, i32 -> vector<16x16xf32>
    %cst_18 = arith.constant 0.000000e+00 : f32
    %56 = vector.broadcast %cst_18 : f32 to vector<16x16xf32>
    %57 = arith.select %54, %56, %55 : vector<16x16xi1>, vector<16x16xf32>
    %c15_i32 = arith.constant 15 : i32
    %58 = vector.broadcast %c15_i32 : i32 to vector<16x16xi32>
    %59 = arith.cmpi eq, %51, %58 : vector<16x16xi32>
    %c15_i32_19 = arith.constant 15 : i32
    %60 = tpu.dynamic_rotate %1 by %c15_i32_19 dim 1 : vector<16x16xf32>, i32 -> vector<16x16xf32>
    %cst_20 = arith.constant 0.000000e+00 : f32
    %61 = vector.broadcast %cst_20 : f32 to vector<16x16xf32>
    %62 = arith.select %59, %61, %60 : vector<16x16xi1>, vector<16x16xf32>
    %63 = arith.addf %1, %57 : vector<16x16xf32>
    %64 = arith.addf %63, %62 : vector<16x16xf32>
    %c0_i32_21 = arith.constant 0 : i32
    %65 = vector.broadcast %c0_i32_21 : i32 to vector<16x16xi32>
    %66 = arith.cmpi eq, %52, %65 : vector<16x16xi32>
    %c1_i32_22 = arith.constant 1 : i32
    %67 = tpu.dynamic_rotate %64 by %c1_i32_22 dim 0 : vector<16x16xf32>, i32 -> vector<16x16xf32>
    %cst_23 = arith.constant 0.000000e+00 : f32
    %68 = vector.broadcast %cst_23 : f32 to vector<16x16xf32>
    %69 = arith.select %66, %68, %67 : vector<16x16xi1>, vector<16x16xf32>
    %c15_i32_24 = arith.constant 15 : i32
    %70 = vector.broadcast %c15_i32_24 : i32 to vector<16x16xi32>
    %71 = arith.cmpi eq, %52, %70 : vector<16x16xi32>
    %c15_i32_25 = arith.constant 15 : i32
    %72 = tpu.dynamic_rotate %64 by %c15_i32_25 dim 0 : vector<16x16xf32>, i32 -> vector<16x16xf32>
    %cst_26 = arith.constant 0.000000e+00 : f32
    %73 = vector.broadcast %cst_26 : f32 to vector<16x16xf32>
    %74 = arith.select %71, %73, %72 : vector<16x16xi1>, vector<16x16xf32>
    %75 = arith.addf %64, %69 : vector<16x16xf32>
    %76 = arith.addf %75, %74 : vector<16x16xf32>
    %cst_27 = arith.constant 1.125000e+00 : f32
    %77 = vector.broadcast %cst_27 : f32 to vector<16x16xf32>
    %78 = arith.mulf %77, %1 : vector<16x16xf32>
    %cst_28 = arith.constant 1.250000e-01 : f32
    %79 = vector.broadcast %cst_28 : f32 to vector<16x16xf32>
    %80 = arith.mulf %79, %76 : vector<16x16xf32>
    %81 = arith.subf %78, %80 : vector<16x16xf32>
    %82 = math.absf %81 : vector<16x16xf32>
    %83 = vector.shape_cast %82 : vector<16x16xf32> to vector<1x16x16xf32>
    %cst_29 = arith.constant dense<0.000000e+00> : vector<1xf32>
    %84 = vector.multi_reduction <add>, %83, %cst_29 [1, 2] : vector<1x16x16xf32> to vector<1xf32>
    %85 = vector.shape_cast %84 : vector<1xf32> to vector<1x1x1xf32>
    %86 = vector.extract %85[0, 0, 0] : f32 from vector<1x1x1xf32>
    %87 = tpu.iota {dimensions = array<i32: 2>} : vector<1x8x128xi32>
    %88 = tpu.iota {dimensions = array<i32: 1>} : vector<1x8x128xi32>
    %c0_i32_30 = arith.constant 0 : i32
    %89 = vector.broadcast %c0_i32_30 : i32 to vector<1x8x128xi32>
    %90 = arith.cmpi eq, %88, %89 : vector<1x8x128xi32>
    %c0_i32_31 = arith.constant 0 : i32
    %91 = vector.broadcast %c0_i32_31 : i32 to vector<1x8x128xi32>
    %92 = arith.cmpi eq, %87, %91 : vector<1x8x128xi32>
    %93 = arith.andi %90, %92 : vector<1x8x128xi1>
    %c0_i32_32 = arith.constant 0 : i32
    %94 = vector.broadcast %c0_i32_32 : i32 to vector<1x8x128xi32>
    %95 = arith.cmpi eq, %88, %94 : vector<1x8x128xi32>
    %c1_i32_33 = arith.constant 1 : i32
    %96 = vector.broadcast %c1_i32_33 : i32 to vector<1x8x128xi32>
    %97 = arith.cmpi eq, %87, %96 : vector<1x8x128xi32>
    %98 = arith.andi %95, %97 : vector<1x8x128xi1>
    %cst_34 = arith.constant 0.000000e+00 : f32
    %99 = vector.broadcast %86 : f32 to vector<1x8x128xf32>
    %100 = vector.broadcast %cst_34 : f32 to vector<1x8x128xf32>
    %101 = arith.select %98, %99, %100 : vector<1x8x128xi1>, vector<1x8x128xf32>
    %102 = vector.broadcast %50 : f32 to vector<1x8x128xf32>
    %103 = arith.select %93, %102, %101 : vector<1x8x128xi1>, vector<1x8x128xf32>
    %c0_35 = arith.constant 0 : index
    %c0_36 = arith.constant 0 : index
    %c0_37 = arith.constant 0 : index
    %104 = vector.load %arg3[%c0_35, %c0_36, %c0_37] : memref<1x8x128xf32, #tpu.memory_space<vmem>>, vector<1x8x128xf32>
    tpu.vector_store %arg3[%c0_35, %c0_36, %c0_37], %103 {strides = array<i32>} : memref<1x8x128xf32, #tpu.memory_space<vmem>>, vector<1x8x128xf32>,
    return
  }
  func.func @transform_0(%arg0: i32) -> (i32, i32, i32) {
    %c0_i32 = arith.constant 0 : i32
    %c0_i32_0 = arith.constant 0 : i32
    %c0_i32_1 = arith.constant 0 : i32
    return %arg0, %c0_i32, %c0_i32_0 : i32, i32, i32
  }
  func.func @transform_1(%arg0: i32) -> (i32, i32, i32) {
    %c0_i32 = arith.constant 0 : i32
    %c0_i32_0 = arith.constant 0 : i32
    %c0_i32_1 = arith.constant 0 : i32
    return %arg0, %c0_i32, %c0_i32_0 : i32, i32, i32
  }
  func.func @transform_2(%arg0: i32) -> (i32, i32, i32) {
    %c0_i32 = arith.constant 0 : i32
    %c0_i32_0 = arith.constant 0 : i32
    %c0_i32_1 = arith.constant 0 : i32
    return %arg0, %c0_i32, %c0_i32_0 : i32, i32, i32
  }
}

</mosaic_0001>

<llo_original>
// kernel: tpu_custom_call.1
$region0: #{tpu_custom_call.1}
  #allocation0 [shape = 'u32[]', space=smem, size = 0x4, offset = 0x4, fixed_abs, tag = 'smem constant byte address 0x4 - core index']
  #allocation1 [shape = 'u32[144,128]{1,0:T(1,128)}', space=vmem, size = 0x12000, scoped, tag = 'internal scratch']
  %s0 = inlined_call_operand.hbm [shape: f32[2,16,16], index: 0, kind: input, shape index: {}]
  %s1 = inlined_call_operand.hbm [shape: f32[2,16,16], index: 1, kind: input, shape index: {}]
  %s2 = inlined_call_operand.hbm [shape: f32[2,8,128], index: 2, kind: output, shape index: {}]
  %s3 = sld [smem:[#allocation0]]
  $region49: #{tpu_custom_call.1} parent=0
    _
  %s5 = ssub.s32 1, %s3
  %s6 = scalar_select 0, %s5, %s3
  $region1: #{tpu_custom_call.1} parent=0
    #allocation2 [shape = 'u8[16384]{0}', space=vmem, size = 0x4000, scoped, tag = 'input window, operand 0']
    #allocation3 [shape = 's32[2]{0}', space=sflag, size = 0x8, scoped, tag = 'scoped memory for tpu_custom_call.1']
    #allocation4 [shape = 's32[2]{0}', space=sflag, size = 0x8, scoped, tag = 'scoped memory for tpu_custom_call.1']
    #allocation5 [shape = 'u8[16384]{0}', space=vmem, size = 0x4000, scoped, tag = 'input window, operand 1']
    #allocation6 [shape = 's32[2]{0}', space=sflag, size = 0x8, scoped, tag = 'scoped memory for tpu_custom_call.1']
    #allocation7 [shape = 'u8[8192]{0}', space=vmem, size = 0x2000, scoped, tag = 'output window, operand 0']
    %7 = vsyncpa [#allocation3], 0
    %s8 = scalar_lea.sflag [#allocation3], 1
    %9 = vsyncpa %s8, 0
    %10 = vsyncpa [#allocation6], 0
    %s11 = scalar_lea.sflag [#allocation6], 1
    %12 = vsyncpa %s11, 0
    %13 = vsyncpa [#allocation4], 0
    %s14 = scalar_lea.sflag [#allocation4], 1
    %15 = vsyncpa %s14, 0
    loop: start=0, step=1, limit=4
    $region2: #{tpu_custom_call.1} parent=1 // loop_pre_header
      _
    $region3: #{tpu_custom_call.1} parent=1 // loop_header
      %s17 = sphi 0, %s21
      %p18 = scmp.ge.s32.totalorder %s17, 4
      %s27 = sphi 0, %s29
      %s30 = sphi 0, %s27
      %s31 = sphi 0, %s30
      %s47 = sphi 0, %s31
      %s53 = sphi 0, %s55
      %s56 = sphi 0, %s53
      %s57 = sphi 0, %s56
      %s73 = sphi 0, %s57
      %s79 = sphi 0, %s81
      %s82 = sphi 0, %s79
      %s83 = sphi 0, %s82
      %s99 = sphi 0, %s83
    $region4: #{tpu_custom_call.1} parent=1 // loop_header_branch
      %20 = sbr.rel (%p18) target = $region8
    $region5: #{tpu_custom_call.1} parent=1 // loop_body
      %s22 = ssub.s32 %s17, 1
      %s23 = ssub.s32 %s17, 2
      %s24 = sadd.s32 %s17, 1
      %s25 = ssub.s32 %s17, %s24
      %p26 = scmp.eq.s32.totalorder %s25, 0
      %s28 = sadd.s32 %s27, 1
      %s29 = scalar_select %p26, %s27, %s28
      %p32 = pneg %p26
      %p33 = scmp.eq.s32.totalorder %s17, 1
      %p34 = por %p32, %p33
      %p35 = scmp.ne.s32.totalorder %s27, %s30
      %p36 = scmp.eq.s32.totalorder %s17, 0
      %p37 = por %p35, %p36
      %p38 = scmp.ne.s32.totalorder %s27, %s30
      %p39 = scmp.eq.s32.totalorder %s22, 1
      %p40 = por %p38, %p39
      %p41 = scmp.ne.s32.totalorder %s30, %s31
      %p42 = scmp.eq.s32.totalorder %s22, 0
      %p43 = por %p41, %p42
      %p44 = scmp.ne.s32.totalorder %s30, %s31
      %p45 = scmp.eq.s32.totalorder %s23, 1
      %p46 = por %p44, %p45
      %p48 = scmp.ne.s32.totalorder %s31, %s47
      %p49 = scmp.eq.s32.totalorder %s23, 0
      %p50 = por %p48, %p49
      %s51 = ssub.s32 %s17, %s24
      %p52 = scmp.eq.s32.totalorder %s51, 0
      %s54 = sadd.s32 %s53, 1
      %s55 = scalar_select %p52, %s53, %s54
      %p58 = pneg %p52
      %p59 = scmp.eq.s32.totalorder %s17, 1
      %p60 = por %p58, %p59
      %p61 = scmp.ne.s32.totalorder %s53, %s56
      %p62 = scmp.eq.s32.totalorder %s17, 0
      %p63 = por %p61, %p62
      %p64 = scmp.ne.s32.totalorder %s53, %s56
      %p65 = scmp.eq.s32.totalorder %s22, 1
      %p66 = por %p64, %p65
      %p67 = scmp.ne.s32.totalorder %s56, %s57
      %p68 = scmp.eq.s32.totalorder %s22, 0
      %p69 = por %p67, %p68
      %p70 = scmp.ne.s32.totalorder %s56, %s57
      %p71 = scmp.eq.s32.totalorder %s23, 1
      %p72 = por %p70, %p71
      %p74 = scmp.ne.s32.totalorder %s57, %s73
      %p75 = scmp.eq.s32.totalorder %s23, 0
      %p76 = por %p74, %p75
      %s77 = ssub.s32 %s17, %s24
      %p78 = scmp.eq.s32.totalorder %s77, 0
      %s80 = sadd.s32 %s79, 1
      %s81 = scalar_select %p78, %s79, %s80
      %p84 = pneg %p78
      %p85 = scmp.eq.s32.totalorder %s17, 1
      %p86 = por %p84, %p85
      %p87 = scmp.ne.s32.totalorder %s79, %s82
      %p88 = scmp.eq.s32.totalorder %s17, 0
      %p89 = por %p87, %p88
      %p90 = scmp.ne.s32.totalorder %s79, %s82
      %p91 = scmp.eq.s32.totalorder %s22, 1
      %p92 = por %p90, %p91
      %p93 = scmp.ne.s32.totalorder %s82, %s83
      %p94 = scmp.eq.s32.totalorder %s22, 0
      %p95 = por %p93, %p94
      %p96 = scmp.ne.s32.totalorder %s82, %s83
      %p97 = scmp.eq.s32.totalorder %s23, 1
      %p98 = por %p96, %p97
      %p100 = scmp.ne.s32.totalorder %s83, %s99
      %p101 = scmp.eq.s32.totalorder %s23, 0
      %p102 = por %p100, %p101
      %p103 = scmp.le.s32.totalorder 1, %s17
      %p104 = scmp.lt.s32.totalorder %s17, 3
      %p105 = pnand %p103, %p104
      %p106 = pneg %p105
      // Predicated region
      $region9: #{tpu_custom_call.1} parent=5 // pred_check
        _
      $region10: #{tpu_custom_call.1} parent=5 // pred_check_branch
        %108 = sbr.rel (%p105) target = $region12
      $region11: #{tpu_custom_call.1} parent=5 // pred_region
        %s109 = ssub.s32 %s17, 1
      $region12: #{tpu_custom_call.1} parent=5 // pred_fallthru
        _
      %p110 = scmp.lt.s32.totalorder %s17, 2
      // Predicated region
      $region13: #{tpu_custom_call.1} parent=5 // pred_check
        %p111 = pneg %p110
      $region14: #{tpu_custom_call.1} parent=5 // pred_check_branch
        %113 = sbr.rel (%p111) target = $region16
      $region15: #{tpu_custom_call.1} parent=5 // pred_region
        // Predicated region
        $region17: #{tpu_custom_call.1} parent=15 // pred_check
          %p114 = pneg %p37
        $region18: #{tpu_custom_call.1} parent=15 // pred_check_branch
          %116 = sbr.rel (%p114) target = $region20
        $region19: #{tpu_custom_call.1} parent=15 // pred_region
          %s117 = sand.u32 %s27, 1
          %s118 = scalar_lea.sflag [#allocation3], %s117
          %s119 = sand.u32 %s27, 1
          %s120 = smul.addr %s119, 16
          %s121 = scalar_lea.vmem [#allocation2], %s120
          %s123 = ssub.s32 256, 256
          %124 = vsyncadd %s118, %s123
          %s125 = smul.addr %s17, 2
          %s126 = smul.addr %s125, 128
          %s127 = scalar_lea.hbm %s0, %s126
          %s128 = sshll.u32 %s121, 4
          %s129 = int_to_ptr.vmem [resolvable:$true] %s128
          %134 = dma.hbm_to_vmem [thread:$0]  %s127, 256, %s129, %s118, 128, 128, 8
        $region20: #{tpu_custom_call.1} parent=15 // pred_fallthru
          _
        // Predicated region
        $region21: #{tpu_custom_call.1} parent=15 // pred_check
          %p135 = pneg %p63
        $region22: #{tpu_custom_call.1} parent=15 // pred_check_branch
          %137 = sbr.rel (%p135) target = $region24
        $region23: #{tpu_custom_call.1} parent=15 // pred_region
          %s138 = sand.u32 %s53, 1
          %s139 = scalar_lea.sflag [#allocation6], %s138
          %s140 = sand.u32 %s53, 1
          %s141 = smul.addr %s140, 16
          %s142 = scalar_lea.vmem [#allocation5], %s141
          %s144 = ssub.s32 256, 256
          %145 = vsyncadd %s139, %s144
          %s146 = smul.addr %s17, 2
          %s147 = smul.addr %s146, 128
          %s148 = scalar_lea.hbm %s1, %s147
          %s149 = sshll.u32 %s142, 4
          %s150 = int_to_ptr.vmem [resolvable:$true] %s149
          %155 = dma.hbm_to_vmem [thread:$0]  %s148, 256, %s150, %s139, 128, 128, 8
        $region24: #{tpu_custom_call.1} parent=15 // pred_fallthru
          _
      $region16: #{tpu_custom_call.1} parent=5 // pred_fallthru
        _
      %p156 = scmp.le.s32.totalorder 1, %s17
      %p157 = scmp.lt.s32.totalorder %s17, 3
      %p158 = pnand %p156, %p157
      %p159 = pneg %p158
      // Predicated region
      $region25: #{tpu_custom_call.1} parent=5 // pred_check
        _
      $region26: #{tpu_custom_call.1} parent=5 // pred_check_branch
        %161 = sbr.rel (%p158) target = $region28
      $region27: #{tpu_custom_call.1} parent=5 // pred_region
        %s162 = ssub.s32 %s17, 1
        %s163 = sand.u32 %s30, 1
        %s164 = scalar_lea.sflag [#allocation3], %s163
        %s165 = sand.u32 %s30, 1
        %s166 = smul.addr %s165, 16
        %s167 = scalar_lea.vmem [#allocation2], %s166
        // Predicated region
        $region29: #{tpu_custom_call.1} parent=27 // pred_check
          %p168 = pneg %p43
        $region30: #{tpu_custom_call.1} parent=27 // pred_check_branch
          %170 = sbr.rel (%p168) target = $region32
        $region31: #{tpu_custom_call.1} parent=27 // pred_region
          %171 = dma.done %s164, 256
        $region32: #{tpu_custom_call.1} parent=27 // pred_fallthru
          _
        %s172 = sand.u32 %s56, 1
        %s173 = scalar_lea.sflag [#allocation6], %s172
        %s174 = sand.u32 %s56, 1
        %s175 = smul.addr %s174, 16
        %s176 = scalar_lea.vmem [#allocation5], %s175
        // Predicated region
        $region33: #{tpu_custom_call.1} parent=27 // pred_check
          %p177 = pneg %p69
        $region34: #{tpu_custom_call.1} parent=27 // pred_check_branch
          %179 = sbr.rel (%p177) target = $region36
        $region35: #{tpu_custom_call.1} parent=27 // pred_region
          %180 = dma.done %s173, 256
        $region36: #{tpu_custom_call.1} parent=27 // pred_fallthru
          _
        %s181 = sand.u32 %s30, 1
        %s182 = scalar_lea.sflag [#allocation3], %s181
        %s183 = sand.u32 %s30, 1
        %s184 = smul.addr %s183, 16
        %s185 = scalar_lea.vmem [#allocation2], %s184
        %p186 = pneg %p43
        %p187 = pneg %p40
        %s188 = sand.u32 %s56, 1
        %s189 = scalar_lea.sflag [#allocation6], %s188
        %s190 = sand.u32 %s56, 1
        %s191 = smul.addr %s190, 16
        %s192 = scalar_lea.vmem [#allocation5], %s191
        %p193 = pneg %p69
        %p194 = pneg %p66
        %p195 = pneg %p95
        %p196 = pneg %p92
        %s197 = sand.u32 %s82, 1
        %s198 = scalar_lea.sflag [#allocation4], %s197
        %s199 = sand.u32 %s82, 1
        %s200 = smul.addr %s199, 8
        %s201 = scalar_lea.vmem [#allocation7], %s200
        %v202 = vld [vmem:[%s167] sm:$0xff]
        %v203 = vld [vmem:[%s167 + $0x8] sm:$0xff]
        %v204 = vld [vmem:[%s176] sm:$0xff]
        %v205 = vld [vmem:[%s176 + $0x8] sm:$0xff]
        %v206 = vand.u32 2147483647, %v202
        %v207 = vand.u32 2147483647, %v203
        %v208 = vsub.f32 0.0, %v206
        %v209 = vsub.f32 0.0, %v207
        %v210 = vmul.f32 %v208, 1.442695
        %v211 = vpow.pop %v210
        %v212 = vmul.f32 %v209, 1.442695
        %v213 = vpow.pop %v212
        %v214 = vadd.f32 %v211, 1.0
        %v215 = vadd.f32 %v213, 1.0
        %v216 = vlog2.pop %v214
        %v217 = vmul.f32 %v216, 0.6931472
        %v218 = vlog2.pop %v215
        %v219 = vmul.f32 %v218, 0.6931472
        %v220 = vrcp.pop %v214
        %v221 = vmul.f32 1.0, %v220
        %v222 = vrcp.pop %v215
        %v223 = vmul.f32 1.0, %v222
        %vm224 = vcmp.ge.f32.partialorder %v202, 0.0
        %vm225 = vcmp.ge.f32.partialorder %v203, 0.0
        %v226 = vmul.f32 %v211, %v221
        %v227 = vmul.f32 %v213, %v223
        %v228 = vsel %vm224, %v221, %v226
        %v229 = vsel %vm225, %v223, %v227
        %v230 = vsub.f32 0.0, %v217
        %v231 = vsub.f32 0.0, %v219
        %v232 = vsub.f32 %v202, %v217
        %v233 = vsub.f32 %v203, %v219
        %v234 = vsel %vm224, %v230, %v232
        %v235 = vsel %vm225, %v231, %v233
        %v236 = vsub.f32 0.0, %v202
        %v237 = vsub.f32 0.0, %v203
        %v238 = vsub.f32 %v236, %v217
        %v239 = vsub.f32 %v237, %v219
        %v240 = vsel %vm224, %v238, %v230
        %v241 = vsel %vm225, %v239, %v231
        %v242 = vmul.f32 %v204, %v228
        %v243 = vmul.f32 %v205, %v229
        %v244 = vsub.f32 1.0, %v204
        %v245 = vsub.f32 1.0, %v205
        %v246 = vsub.f32 1.0, %v228
        %v247 = vsub.f32 1.0, %v229
        %v248 = vmul.f32 %v244, %v246
        %v249 = vmul.f32 %v245, %v247
        %v250 = vadd.f32 %v242, %v248
        %v251 = vadd.f32 %v243, %v249
        %v252 = vmul.f32 %v204, %v234
        %v253 = vmul.f32 %v205, %v235
        %v254 = vmul.f32 %v244, %v240
        %v255 = vmul.f32 %v245, %v241
        %v256 = vadd.f32 %v252, %v254
        %v257 = vadd.f32 %v253, %v255
        %v258 = vsub.f32 1.0, %v250
        %v259 = vsub.f32 1.0, %v251
        %v260 = vmul.f32 %v258, %v258
        %v261 = vmul.f32 %v259, %v259
        %v262 = vsub.f32 0.0, %v260
        %v263 = vsub.f32 0.0, %v261
        %v264 = vmul.f32 %v262, %v256
        %v265 = vmul.f32 %v263, %v257
        %vm266 = vcmask 130048
        %v267 = vsel %vm266, %v264, 0.0
        %v268 = vsel %vm266, %v265, 0.0
        %v269 = vadd.f32 %v267, %v268
        %270 = vadd.xlane.f32.xlu0 %v269
        %v271 = vpop.xlane.xlu0 %270
        %v272 = vrot.slane %v271, 4
        %v273 = vadd.f32 %v271, %v272
        %v274 = vrot.slane %v273, 2
        %v275 = vadd.f32 %v273, %v274
        %v276 = vrot.slane %v275, 1
        %v277 = vadd.f32 %v275, %v276
        %s278 = vtos %v277
        %v279 = vlaneseq
        %v280 = vand.u32 %v279, 127
        %v281 = vlaneseq
        %v282 = vshrl.u32 %v281, 7
        %v283 = vadd.s32 %v282, 8
        %vm284 = vcmp.eq.s32.totalorder %v280, 0
        %vm285 = vcmask 1047680
        %286 = vrot.lane.b32.xlu0 %v202, 16
        %v287 = vpop.permute.xlu0 %286
        %v288 = vsel %vm285, %v287, %v202
        %289 = vrot.lane.b32.xlu0 %v203, 16
        %v290 = vpop.permute.xlu0 %289
        %v291 = vsel %vm285, %v290, %v203
        %292 = vrot.lane.b32.xlu0 %v288, 16
        %v293 = vpop.permute.xlu0 %292
        %294 = vrot.lane.b32.xlu0 %v291, 16
        %v295 = vpop.permute.xlu0 %294
        %v296 = vsel %vm285, %v293, %v202
        %v297 = vsel %vm285, %v295, %v203
        %300 = vrot.lane.b32.xlu0 %v296, 113
        %v301 = vpop.permute.xlu0 %300
        %302 = vrot.lane.b32.xlu0 %v297, 113
        %v303 = vpop.permute.xlu0 %302
        %v306 = vsel %vm284, 0.0, %v301
        %v307 = vsel %vm284, 0.0, %v303
        %vm308 = vcmp.eq.s32.totalorder %v280, 15
        %309 = vrot.lane.b32.xlu0 %v296, 127
        %v310 = vpop.permute.xlu0 %309
        %311 = vrot.lane.b32.xlu0 %v297, 127
        %v312 = vpop.permute.xlu0 %311
        %v315 = vsel %vm308, 0.0, %v310
        %v316 = vsel %vm308, 0.0, %v312
        %v317 = vadd.f32 %v202, %v306
        %v318 = vadd.f32 %v203, %v307
        %v319 = vadd.f32 %v317, %v315
        %v320 = vadd.f32 %v318, %v316
        %vm321 = vcmp.eq.s32.totalorder %v282, 0
        %vm322 = vcmp.eq.s32.totalorder %v283, 0
        %v323 = vrot.slane %v319, 7
        %v324 = vrot.slane %v320, 7
        %vm325 = vcmp.lt.s32.totalorder %v282, 1
        %v326 = vsel %vm325, %v323, %v324
        %v327 = vsel %vm325, %v324, %v323
        %v328 = vsel %vm321, 0.0, %v327
        %v329 = vsel %vm322, 0.0, %v326
        %vm330 = vcmp.eq.s32.totalorder %v282, 15
        %vm331 = vcmp.eq.s32.totalorder %v283, 15
        %v332 = vrot.slane %v319, 1
        %v333 = vrot.slane %v320, 1
        %vm334 = vcmp.lt.s32.totalorder %v282, 7
        %v335 = vsel %vm334, %v332, %v333
        %v336 = vsel %vm334, %v333, %v332
        %v337 = vsel %vm330, 0.0, %v335
        %v338 = vsel %vm331, 0.0, %v336
        %v339 = vadd.f32 %v319, %v328
        %v340 = vadd.f32 %v320, %v329
        %v341 = vadd.f32 %v339, %v337
        %v342 = vadd.f32 %v340, %v338
        %v343 = vmul.f32 %v202, 1.125
        %v344 = vmul.f32 %v203, 1.125
        %v345 = vmul.f32 %v341, 0.125
        %v346 = vmul.f32 %v342, 0.125
        %v347 = vsub.f32 %v343, %v345
        %v348 = vsub.f32 %v344, %v346
        %v349 = vand.u32 2147483647, %v347
        %v350 = vand.u32 2147483647, %v348
        %v351 = vsel %vm266, %v349, 0.0
        %v352 = vsel %vm266, %v350, 0.0
        %v353 = vadd.f32 %v351, %v352
        %354 = vadd.xlane.f32.xlu0 %v353
        %v355 = vpop.xlane.xlu0 %354
        %v356 = vrot.slane %v355, 4
        %v357 = vadd.f32 %v355, %v356
        %v358 = vrot.slane %v357, 2
        %v359 = vadd.f32 %v357, %v358
        %v360 = vrot.slane %v359, 1
        %v361 = vadd.f32 %v359, %v360
        %s362 = vtos %v361
        %vm363 = vmand %vm321, %vm284
        %vm364 = vcmp.eq.s32.totalorder %v280, 1
        %vm365 = vmand %vm321, %vm364
        %v366 = vstv %s362
        %v367 = vsel %vm365, %v366, 0.0
        %v368 = vstv %s278
        %v369 = vsel %vm363, %v368, %v367
        %370 = vst [vmem:[%s201] sm:$0xff] %v369
        %s371 = sand.u32 %s82, 1
        %s372 = scalar_lea.sflag [#allocation4], %s371
        %s373 = sand.u32 %s82, 1
        %s374 = smul.addr %s373, 8
        %s375 = scalar_lea.vmem [#allocation7], %s374
        // Predicated region
        $region37: #{tpu_custom_call.1} parent=27 // pred_check
          %p376 = pneg %p92
        $region38: #{tpu_custom_call.1} parent=27 // pred_check_branch
          %378 = sbr.rel (%p376) target = $region40
        $region39: #{tpu_custom_call.1} parent=27 // pred_region
          %s380 = ssub.s32 128, 128
          %381 = vsyncadd %s372, %s380
          %s382 = smul.addr %s22, 128
          %s383 = scalar_lea.hbm %s2, %s382
          %s385 = sshll.u32 %s375, 4
          %s386 = int_to_ptr.vmem [resolvable:$true] %s385
          %388 = dma.vmem_to_hbm [thread:$0]  %s386, 128, %s383, %s372
        $region40: #{tpu_custom_call.1} parent=27 // pred_fallthru
          _
      $region28: #{tpu_custom_call.1} parent=5 // pred_fallthru
        _
      %p389 = scmp.le.s32.totalorder 2, %s17
      // Predicated region
      $region41: #{tpu_custom_call.1} parent=5 // pred_check
        %p390 = pneg %p389
      $region42: #{tpu_custom_call.1} parent=5 // pred_check_branch
        %392 = sbr.rel (%p390) target = $region44
      $region43: #{tpu_custom_call.1} parent=5 // pred_region
        %s393 = ssub.s32 %s17, 2
        // Predicated region
        $region45: #{tpu_custom_call.1} parent=43 // pred_check
          %p394 = pneg %p98
        $region46: #{tpu_custom_call.1} parent=43 // pred_check_branch
          %396 = sbr.rel (%p394) target = $region48
        $region47: #{tpu_custom_call.1} parent=43 // pred_region
          %s397 = sand.u32 %s83, 1
          %s398 = scalar_lea.sflag [#allocation4], %s397
          %s399 = sand.u32 %s83, 1
          %s400 = smul.addr %s399, 8
          %s401 = scalar_lea.vmem [#allocation7], %s400
          %402 = dma.done %s398, 128
        $region48: #{tpu_custom_call.1} parent=43 // pred_fallthru
          _
      $region44: #{tpu_custom_call.1} parent=5 // pred_fallthru
        _
    $region6: #{tpu_custom_call.1} parent=1 // loop_footer
      %s21 = sadd.s32 1, %s17
    $region7: #{tpu_custom_call.1} parent=1 // loop_footer_branch
      %16 = sbr.rel target = $region3
    $region8: #{tpu_custom_call.1} parent=1 // loop_exit
      _
    %403 = vsyncpa [#allocation3], 1
    %s404 = scalar_lea.sflag [#allocation3], 1
    %405 = vsyncpa %s404, 1
    %406 = vsyncpa [#allocation6], 1
    %s407 = scalar_lea.sflag [#allocation6], 1
    %408 = vsyncpa %s407, 1
    %409 = vsyncpa [#allocation4], 1
    %s410 = scalar_lea.sflag [#allocation4], 1
    %411 = vsyncpa %s410, 1

</llo_original>
